<compile_context>
chip_gen: v7x
topology: tpu7x:2x2x1
jax: 0.10.0
libtpu: 0.0.40
codegen_flags: <defaults>
</compile_context>

<pallas_src>
import jax
import jax.numpy as jnp
from jax.experimental import pallas as pl
from jax.experimental.pallas import tpu as pltpu


# ---------------------------------------------------------------------------
# torch.view-style shape resolution (single -1 allowed)
# ---------------------------------------------------------------------------
def _resolve_shape(numel, shape):
    shape = tuple(int(s) for s in shape)
    if -1 in shape:
        assert shape.count(-1) == 1, "only one -1 allowed in view shape"
        known = 1
        for s in shape:
            if s != -1:
                known *= s
        assert numel % known == 0, "invalid view shape"
        shape = tuple(numel // known if s == -1 else s for s in shape)
    total = 1
    for s in shape:
        total *= s
    assert total == numel, "view shape incompatible with number of elements"
    return shape


# ---------------------------------------------------------------------------
# Primary path: zero-copy — output buffer aliases the input buffer
# ---------------------------------------------------------------------------
def _alias_noop_kernel(x_ref, o_ref):
    del x_ref
    # The output aliases the input (input_output_aliases={0: 0}), so the data
    # is already there; touch() just pins a fake read+write dependency so the
    # aliased output materializes.  No DMA, no HBM traffic.
    pltpu.touch(o_ref)


def _reshape_zero_copy(x):
    return pl.pallas_call(
        _alias_noop_kernel,
        out_shape=jax.ShapeDtypeStruct(x.shape, x.dtype),
        in_specs=[pl.BlockSpec(memory_space=pl.ANY)],
        out_specs=pl.BlockSpec(memory_space=pl.ANY),
        input_output_aliases={0: 0},
        compiler_params=pltpu.CompilerParams(has_side_effects=True),
    )(x)


# ---------------------------------------------------------------------------
# Fallback path: tuned identity-copy kernel (HBM-bandwidth bound)
# ---------------------------------------------------------------------------
_LANE = 128
# Per-tile budget; x4 with double-buffered in+out ≈ 24 MiB, inside the 32 MiB
# scoped-VMEM limit requested below and safe on v5e/v6e/v7x physical VMEM.
_TILE_BUDGET_BYTES = 6 * 1024 * 1024


def _copy_kernel(x_ref, o_ref):
    # Identity copy of the current lane-dense tile.
    o_ref[...] = x_ref[...]


def _pick_tile_rows(rows, itemsize):
    # Sublane packing: 8 rows/vreg for 4-byte, 16 for 2-byte, 32 for 1-byte.
    sublane = max(8, 32 // int(itemsize))
    if rows <= sublane:
        return rows  # single full-extent block (always legal)
    budget_rows = _TILE_BUDGET_BYTES // (_LANE * int(itemsize))
    budget_rows = max(sublane, (budget_rows // sublane) * sublane)
    # Keep >= 2 grid steps so the 'parallel' axis can shard across the two
    # TensorCores on v7x (and to keep the pipeline busy elsewhere).
    half_rows = -(-rows // 2)
    half_rows = -(-half_rows // sublane) * sublane
    return min(budget_rows, half_rows)


def _reshape_copy(x):
    numel = int(x.size)
    itemsize = int(jnp.dtype(x.dtype).itemsize)

    # Lane-dense slab: pad to a multiple of 128 lanes instead of using a slow
    # single-sublane (1, numel) block with masked partial stores.
    pad = (-numel) % _LANE
    x_flat = x.reshape(-1)
    if pad:
        x_flat = jnp.pad(x_flat, (0, pad))
    rows = (numel + pad) // _LANE
    x2d = x_flat.reshape(rows, _LANE)

    tile_rows = _pick_tile_rows(rows, itemsize)
    grid = (pl.cdiv(rows, tile_rows),)  # ragged last block is masked by Pallas

    out2d = pl.pallas_call(
        _copy_kernel,
        out_shape=jax.ShapeDtypeStruct((rows, _LANE), x.dtype),
        grid_spec=pltpu.PrefetchScalarGridSpec(
            num_scalar_prefetch=0,
            grid=grid,
            in_specs=[pl.BlockSpec((tile_rows, _LANE), lambda i: (i, 0))],
            out_specs=pl.BlockSpec((tile_rows, _LANE), lambda i: (i, 0)),
        ),
        compiler_params=pltpu.CompilerParams(
            dimension_semantics=("parallel",),
            vmem_limit_bytes=32 * 1024 * 1024,
        ),
        cost_estimate=pl.CostEstimate(
            flops=0, transcendentals=0, bytes_accessed=2 * numel * itemsize),
    )(x2d)

    out_flat = out2d.reshape(-1)
    if pad:
        out_flat = out_flat[:numel]
    return out_flat


# ---------------------------------------------------------------------------
# Public wrapper: torch.Tensor.view(*shape) for contiguous row-major x
# ---------------------------------------------------------------------------
def reshape_pallas(x, shape):
    out_shape = _resolve_shape(int(x.size), shape)
    try:
        # Zero HBM traffic: the pallas_call output aliases the input buffer.
        out_buf = jax.block_until_ready(_reshape_zero_copy(x))
    except Exception:
        # Robust fallback: HBM-roofline-tuned identity copy.
        out_buf = _reshape_copy(x)
    # Free metadata reshape to the requested logical shape (glue, not compute).
    return out_buf.reshape(out_shape)


if __name__ == "__main__":
    key = jax.random.PRNGKey(0)
    # NCHW-style input, as a typical conv activation the Reshape module sees.
    x = jax.random.normal(key, (2, 4, 16, 16), dtype=jnp.float32)

    # Reshape module configured e.g. as Reshape((2, -1)) -> flatten per batch.
    target_shape = (2, -1)

    y = reshape_pallas(x, target_shape)
    y = jax.block_until_ready(y)

    # Correctness check against plain JAX reshape (== torch .view semantics
    # for contiguous tensors).
    ref = x.reshape(2, -1)
    assert y.shape == ref.shape, (y.shape, ref.shape)
    assert y.dtype == ref.dtype
    assert bool(jnp.all(y == ref))

    print("KERNEL_OK")
</pallas_src>

<mosaic_0001>
module attributes {stable_mosaic.version = 11 : i64} {
  func.func @_alias_noop_kernel(%arg0: memref<2x4x16x16xf32, #tpu.memory_space<any>>, %arg1: memref<2x4x16x16xf32, #tpu.memory_space<any>>) attributes {dimension_semantics = [], scalar_prefetch = 0 : i64, scratch_operands = 0 : i64, tpu.core_type = #tpu.core_type<tc>} {
    return
  }
}

module attributes {stable_mosaic.version = 11 : i64} {
  func.func @_copy_kernel(%arg0: i32, %arg1: memref<8x128xf32, #tpu.memory_space<vmem>>, %arg2: memref<8x128xf32, #tpu.memory_space<vmem>>) attributes {dimension_semantics = [#tpu.dimension_semantics<parallel>], iteration_bounds = array<i64: 2>, scalar_prefetch = 0 : i64, scratch_operands = 0 : i64, tpu.core_type = #tpu.core_type<tc>, window_params = [{transform_indices = @transform_0, window_bounds = array<i64: 8, 128>}, {transform_indices = @transform_1, window_bounds = array<i64: 8, 128>}]} {
    %c0 = arith.constant 0 : index
    %c0_0 = arith.constant 0 : index
    %0 = vector.load %arg1[%c0, %c0_0] : memref<8x128xf32, #tpu.memory_space<vmem>>, vector<8x128xf32>
    %c0_1 = arith.constant 0 : index
    %c0_2 = arith.constant 0 : index
    %1 = vector.load %arg2[%c0_1, %c0_2] : memref<8x128xf32, #tpu.memory_space<vmem>>, vector<8x128xf32>
    tpu.vector_store %arg2[%c0_1, %c0_2], %0 {strides = array<i32>} : memref<8x128xf32, #tpu.memory_space<vmem>>, vector<8x128xf32>,
    return
  }
  func.func @transform_0(%arg0: i32) -> (i32, i32) {
    %c0_i32 = arith.constant 0 : i32
    %c0_i32_0 = arith.constant 0 : i32
    return %arg0, %c0_i32 : i32, i32
  }
  func.func @transform_1(%arg0: i32) -> (i32, i32) {
    %c0_i32 = arith.constant 0 : i32
    %c0_i32_0 = arith.constant 0 : i32
    return %arg0, %c0_i32 : i32, i32
  }
}

</mosaic_0001>

<llo_original>
// kernel: tpu_custom_call.1
$region0: #{tpu_custom_call.1}
  #allocation0 [shape = 'u32[]', space=smem, size = 0x4, offset = 0x4, fixed_abs, tag = 'smem constant byte address 0x4 - core index']
  #allocation1 [shape = 'u32[144,128]{1,0:T(1,128)}', space=vmem, size = 0x12000, scoped, tag = 'internal scratch']
  %s0 = inlined_call_operand.hbm [shape: f32[2,4,16,16], index: 0, kind: input, shape index: {}, may-alias: {0,1}]
  %s1 = inlined_call_operand.hbm [shape: f32[2,4,16,16], index: 1, kind: output, shape index: {}, may-alias: {0,1}]
  %s2 = sld [smem:[#allocation0]]
  $region2: #{tpu_custom_call.1} parent=0
    _
  %s4 = ssub.s32 1, %s2
  %s5 = scalar_select 0, %s4, %s2

// kernel: tpu_custom_call.1
$region0: #{tpu_custom_call.1}
  #allocation0 [shape = 'u32[]', space=smem, size = 0x4, offset = 0x4, fixed_abs, tag = 'smem constant byte address 0x4 - core index']
  #allocation1 [shape = 'u32[144,128]{1,0:T(1,128)}', space=vmem, size = 0x12000, scoped, tag = 'internal scratch']
  %s0 = inlined_call_operand.hbm [shape: f32[16,128], index: 0, kind: input, shape index: {}]
  %s1 = inlined_call_operand.hbm [shape: f32[16,128], index: 1, kind: output, shape index: {}]
  %s2 = sld [smem:[#allocation0]]
  $region41: #{tpu_custom_call.1} parent=0
    _
  %s4 = ssub.s32 1, %s2
  %s5 = scalar_select 0, %s4, %s2
  $region1: #{tpu_custom_call.1} parent=0
    #allocation2 [shape = 'u8[8192]{0}', space=vmem, size = 0x2000, scoped, tag = 'input window, operand 0']
    #allocation3 [shape = 's32[2]{0}', space=sflag, size = 0x8, scoped, tag = 'scoped memory for tpu_custom_call.1']
    #allocation4 [shape = 's32[2]{0}', space=sflag, size = 0x8, scoped, tag = 'scoped memory for tpu_custom_call.1']
    #allocation5 [shape = 'u8[8192]{0}', space=vmem, size = 0x2000, scoped, tag = 'output window, operand 0']
    %6 = vsyncpa [#allocation3], 0
    %s7 = scalar_lea.sflag [#allocation3], 1
    %8 = vsyncpa %s7, 0
    %9 = vsyncpa [#allocation4], 0
    %s10 = scalar_lea.sflag [#allocation4], 1
    %11 = vsyncpa %s10, 0
    loop: start=0, step=1, limit=4
    $region2: #{tpu_custom_call.1} parent=1 // loop_pre_header
      _
    $region3: #{tpu_custom_call.1} parent=1 // loop_header
      %s13 = sphi 0, %s17
      %p14 = scmp.ge.s32.totalorder %s13, 4
      %s23 = sphi 0, %s25
      %s26 = sphi 0, %s23
      %s27 = sphi 0, %s26
      %s43 = sphi 0, %s27
      %s49 = sphi 0, %s51
      %s52 = sphi 0, %s49
      %s53 = sphi 0, %s52
      %s69 = sphi 0, %s53
    $region4: #{tpu_custom_call.1} parent=1 // loop_header_branch
      %16 = sbr.rel (%p14) target = $region8
    $region5: #{tpu_custom_call.1} parent=1 // loop_body
      %s18 = ssub.s32 %s13, 1
      %s19 = ssub.s32 %s13, 2
      %s20 = sadd.s32 %s13, 1
      %s21 = ssub.s32 %s13, %s20
      %p22 = scmp.eq.s32.totalorder %s21, 0
      %s24 = sadd.s32 %s23, 1
      %s25 = scalar_select %p22, %s23, %s24
      %p28 = pneg %p22
      %p29 = scmp.eq.s32.totalorder %s13, 1
      %p30 = por %p28, %p29
      %p31 = scmp.ne.s32.totalorder %s23, %s26
      %p32 = scmp.eq.s32.totalorder %s13, 0
      %p33 = por %p31, %p32
      %p34 = scmp.ne.s32.totalorder %s23, %s26
      %p35 = scmp.eq.s32.totalorder %s18, 1
      %p36 = por %p34, %p35
      %p37 = scmp.ne.s32.totalorder %s26, %s27
      %p38 = scmp.eq.s32.totalorder %s18, 0
      %p39 = por %p37, %p38
      %p40 = scmp.ne.s32.totalorder %s26, %s27
      %p41 = scmp.eq.s32.totalorder %s19, 1
      %p42 = por %p40, %p41
      %p44 = scmp.ne.s32.totalorder %s27, %s43
      %p45 = scmp.eq.s32.totalorder %s19, 0
      %p46 = por %p44, %p45
      %s47 = ssub.s32 %s13, %s20
      %p48 = scmp.eq.s32.totalorder %s47, 0
      %s50 = sadd.s32 %s49, 1
      %s51 = scalar_select %p48, %s49, %s50
      %p54 = pneg %p48
      %p55 = scmp.eq.s32.totalorder %s13, 1
      %p56 = por %p54, %p55
      %p57 = scmp.ne.s32.totalorder %s49, %s52
      %p58 = scmp.eq.s32.totalorder %s13, 0
      %p59 = por %p57, %p58
      %p60 = scmp.ne.s32.totalorder %s49, %s52
      %p61 = scmp.eq.s32.totalorder %s18, 1
      %p62 = por %p60, %p61
      %p63 = scmp.ne.s32.totalorder %s52, %s53
      %p64 = scmp.eq.s32.totalorder %s18, 0
      %p65 = por %p63, %p64
      %p66 = scmp.ne.s32.totalorder %s52, %s53
      %p67 = scmp.eq.s32.totalorder %s19, 1
      %p68 = por %p66, %p67
      %p70 = scmp.ne.s32.totalorder %s53, %s69
      %p71 = scmp.eq.s32.totalorder %s19, 0
      %p72 = por %p70, %p71
      %p73 = scmp.le.s32.totalorder 1, %s13
      %p74 = scmp.lt.s32.totalorder %s13, 3
      %p75 = pnand %p73, %p74
      %p76 = pneg %p75
      // Predicated region
      $region9: #{tpu_custom_call.1} parent=5 // pred_check
        _
      $region10: #{tpu_custom_call.1} parent=5 // pred_check_branch
        %78 = sbr.rel (%p75) target = $region12
      $region11: #{tpu_custom_call.1} parent=5 // pred_region
        %s79 = ssub.s32 %s13, 1
      $region12: #{tpu_custom_call.1} parent=5 // pred_fallthru
        _
      %p80 = scmp.lt.s32.totalorder %s13, 2
      // Predicated region
      $region13: #{tpu_custom_call.1} parent=5 // pred_check
        %p81 = pneg %p80
      $region14: #{tpu_custom_call.1} parent=5 // pred_check_branch
        %83 = sbr.rel (%p81) target = $region16
      $region15: #{tpu_custom_call.1} parent=5 // pred_region
        // Predicated region
        $region17: #{tpu_custom_call.1} parent=15 // pred_check
          %p84 = pneg %p33
        $region18: #{tpu_custom_call.1} parent=15 // pred_check_branch
          %86 = sbr.rel (%p84) target = $region20
        $region19: #{tpu_custom_call.1} parent=15 // pred_region
          %s87 = sand.u32 %s23, 1
          %s88 = scalar_lea.sflag [#allocation3], %s87
          %s89 = sand.u32 %s23, 1
          %s90 = smul.addr %s89, 8
          %s91 = scalar_lea.vmem [#allocation2], %s90
          %s93 = ssub.s32 128, 128
          %94 = vsyncadd %s88, %s93
          %s95 = smul.addr %s13, 128
          %s96 = scalar_lea.hbm %s0, %s95
          %s98 = sshll.u32 %s91, 4
          %s99 = int_to_ptr.vmem [resolvable:$true] %s98
          %101 = dma.hbm_to_vmem [thread:$0]  %s96, 128, %s99, %s88
        $region20: #{tpu_custom_call.1} parent=15 // pred_fallthru
          _
      $region16: #{tpu_custom_call.1} parent=5 // pred_fallthru
        _
      %p102 = scmp.le.s32.totalorder 1, %s13
      %p103 = scmp.lt.s32.totalorder %s13, 3
      %p104 = pnand %p102, %p103
      %p105 = pneg %p104
      // Predicated region
      $region21: #{tpu_custom_call.1} parent=5 // pred_check
        _
      $region22: #{tpu_custom_call.1} parent=5 // pred_check_branch
        %107 = sbr.rel (%p104) target = $region24
      $region23: #{tpu_custom_call.1} parent=5 // pred_region
        %s108 = ssub.s32 %s13, 1
        %s109 = sand.u32 %s26, 1
        %s110 = scalar_lea.sflag [#allocation3], %s109
        %s111 = sand.u32 %s26, 1
        %s112 = smul.addr %s111, 8
        %s113 = scalar_lea.vmem [#allocation2], %s112
        // Predicated region
        $region25: #{tpu_custom_call.1} parent=23 // pred_check
          %p114 = pneg %p39
        $region26: #{tpu_custom_call.1} parent=23 // pred_check_branch
          %116 = sbr.rel (%p114) target = $region28
        $region27: #{tpu_custom_call.1} parent=23 // pred_region
          %117 = dma.done %s110, 128
        $region28: #{tpu_custom_call.1} parent=23 // pred_fallthru
          _
        %s118 = sand.u32 %s26, 1
        %s119 = scalar_lea.sflag [#allocation3], %s118
        %s120 = sand.u32 %s26, 1
        %s121 = smul.addr %s120, 8
        %s122 = scalar_lea.vmem [#allocation2], %s121
        %p123 = pneg %p39
        %p124 = pneg %p36
        %p125 = pneg %p65
        %p126 = pneg %p62
        %s127 = sand.u32 %s52, 1
        %s128 = scalar_lea.sflag [#allocation4], %s127
        %s129 = sand.u32 %s52, 1
        %s130 = smul.addr %s129, 8
        %s131 = scalar_lea.vmem [#allocation5], %s130
        %v132 = vld [vmem:[%s113] sm:$0xff]
        %133 = vst [vmem:[%s131] sm:$0xff] %v132
        %s134 = sand.u32 %s52, 1
        %s135 = scalar_lea.sflag [#allocation4], %s134
        %s136 = sand.u32 %s52, 1
        %s137 = smul.addr %s136, 8
        %s138 = scalar_lea.vmem [#allocation5], %s137
        // Predicated region
        $region29: #{tpu_custom_call.1} parent=23 // pred_check
          %p139 = pneg %p62
        $region30: #{tpu_custom_call.1} parent=23 // pred_check_branch
          %141 = sbr.rel (%p139) target = $region32
        $region31: #{tpu_custom_call.1} parent=23 // pred_region
          %s143 = ssub.s32 128, 128
          %144 = vsyncadd %s135, %s143
          %s145 = smul.addr %s18, 128
          %s146 = scalar_lea.hbm %s1, %s145
          %s148 = sshll.u32 %s138, 4
          %s149 = int_to_ptr.vmem [resolvable:$true] %s148
          %151 = dma.vmem_to_hbm [thread:$0]  %s149, 128, %s146, %s135
        $region32: #{tpu_custom_call.1} parent=23 // pred_fallthru
          _
      $region24: #{tpu_custom_call.1} parent=5 // pred_fallthru
        _
      %p152 = scmp.le.s32.totalorder 2, %s13
      // Predicated region
      $region33: #{tpu_custom_call.1} parent=5 // pred_check
        %p153 = pneg %p152
      $region34: #{tpu_custom_call.1} parent=5 // pred_check_branch
        %155 = sbr.rel (%p153) target = $region36
      $region35: #{tpu_custom_call.1} parent=5 // pred_region
        %s156 = ssub.s32 %s13, 2
        // Predicated region
        $region37: #{tpu_custom_call.1} parent=35 // pred_check
          %p157 = pneg %p68
        $region38: #{tpu_custom_call.1} parent=35 // pred_check_branch
          %159 = sbr.rel (%p157) target = $region40
        $region39: #{tpu_custom_call.1} parent=35 // pred_region
          %s160 = sand.u32 %s53, 1
          %s161 = scalar_lea.sflag [#allocation4], %s160
          %s162 = sand.u32 %s53, 1
          %s163 = smul.addr %s162, 8
          %s164 = scalar_lea.vmem [#allocation5], %s163
          %165 = dma.done %s161, 128
        $region40: #{tpu_custom_call.1} parent=35 // pred_fallthru
          _
      $region36: #{tpu_custom_call.1} parent=5 // pred_fallthru
        _
    $region6: #{tpu_custom_call.1} parent=1 // loop_footer
      %s17 = sadd.s32 1, %s13
    $region7: #{tpu_custom_call.1} parent=1 // loop_footer_branch
      %12 = sbr.rel target = $region3
    $region8: #{tpu_custom_call.1} parent=1 // loop_exit
      _
    %166 = vsyncpa [#allocation3], 1
    %s167 = scalar_lea.sflag [#allocation3], 1
    %168 = vsyncpa %s167, 1
    %169 = vsyncpa [#allocation4], 1
    %s170 = scalar_lea.sflag [#allocation4], 1
    %171 = vsyncpa %s170, 1

</llo_original>
